<compile_context>
chip_gen: v6e
topology: v6e:2x2x1
jax: 0.10.0
libtpu: 0.0.40
codegen_flags: <defaults>
</compile_context>

<pallas_src>
import jax
import jax.numpy as jnp
from jax.experimental import pallas as pl
from jax.experimental.pallas import tpu as pltpu


def _round_up(a: int, b: int) -> int:
    return (a + b - 1) // b * b


def _cdiv(a: int, b: int) -> int:
    return (a + b - 1) // b


# --------------------------------------------------------------------------
# Kernel
# --------------------------------------------------------------------------
def _wapr_kernel(x_ref, w_ref, b_ref, idx_ref, pooled_ref, counts_ref,
                 weights_ref):
    # x_ref:       (TN, D)  compute dtype  current tile of subcase embeddings
    # w_ref:       (1, D)   compute dtype  weight-giver Linear weight (resident)
    # b_ref:       (1,)     f32            weight-giver Linear bias (SMEM)
    # idx_ref:     (1, TN)  i32            supercase index per row (lane-dense)
    # pooled_ref:  (TG, D)  f32            grouped weighted-sum accumulator
    # counts_ref:  (TG, 1)  f32            per-group count accumulator
    # weights_ref: (1, TN)  f32            lane-dense sigmoid weights output
    n = pl.program_id(2)

    @pl.when(n == 0)
    def _init():
        pooled_ref[...] = jnp.zeros_like(pooled_ref)
        counts_ref[...] = jnp.zeros_like(counts_ref)

    x = x_ref[...]                                             # (TN, D)
    tg = pooled_ref.shape[0]

    # logits (1, TN) = w_row · xᵀ : last-last contraction (same Q·Kᵀ pattern
    # the MXU handles natively — no (TN, D) XLU transpose of x), f32 result.
    logits = jax.lax.dot_general(
        w_ref[...], x,
        dimension_numbers=(((1,), (1,)), ((), ())),
        preferred_element_type=jnp.float32,
    ) + b_ref[0]
    weights_row = jax.nn.sigmoid(logits)                       # (1, TN), EUP
    weights_ref[...] = weights_row                             # dense vst

    # Group membership: (TG, 1) iota vs (1, TN) indices -> (TG, TN) bool.
    g = pl.program_id(1)
    gids = g * tg + jax.lax.broadcasted_iota(jnp.int32, (tg, 1), 0)
    mask = gids == idx_ref[...]                                # (TG, TN)

    # Weighted one-hot LHS (single select); counts reuse the same mask
    # (select + XLU lane reduce).  Padded rows carry idx == -1 -> never match.
    wonehot = jnp.where(mask, weights_row.astype(x.dtype),
                        jnp.zeros((), x.dtype))                # (TG, TN)
    counts_ref[...] += jnp.sum(jnp.where(mask, 1.0, 0.0),
                               axis=1, keepdims=True)          # (TG, 1)

    # Grouped weighted sum on the MXU (bf16 operands when compute_dtype is
    # bf16), always f32 accumulation.
    pooled_ref[...] += jax.lax.dot_general(
        wonehot, x,
        dimension_numbers=(((1,), (0,)), ((), ())),
        preferred_element_type=jnp.float32,
    )


# --------------------------------------------------------------------------
# Wrapper helpers
# --------------------------------------------------------------------------
def _vmem_budget_bytes() -> int:
    """~85% of physical VMEM; conservative 64 MiB (v7x) fallback."""
    try:
        cap = int(pltpu.get_tpu_info().vmem_capacity_bytes)
    except Exception:
        cap = 64 << 20
    return int(cap * 0.85)


def _tensorcores_per_device() -> int:
    """Best-effort TensorCore count one pallas_call can shard over."""
    try:
        kind = jax.devices()[0].device_kind.lower()
    except Exception:
        return 2
    single_core = any(t in kind for t in
                      ("v2", "v3", "v5e", "v5 lite", "v6e", "v6 lite"))
    return 1 if single_core else 2      # v4 / v5p megacore, v7x: 2 TCs


def _vmem_estimate(tn: int, tg: int, d: int, itemsize: int) -> int:
    dp = _round_up(d, 128)              # lane-padded width inside VMEM
    return (2 * tn * dp * itemsize      # x tile, double-buffered
            + 2 * tg * dp * 4           # pooled accumulator block
            + 2 * tg * 128 * 4          # counts block (lane-padded)
            + 4 * 8 * tn * 4            # idx + weights (1, TN) blocks
            + 2 * 8 * dp * 4            # resident Linear weight row
            + 3 * tg * tn * 4           # (TG, TN) mask / select intermediates
            + (2 << 20))                # compiler scratch headroom


def _select_tiles(n_rows, d, num_groups, tile_n, tile_g, itemsize, budget):
    tn = min(_round_up(tile_n, 128), _round_up(max(n_rows, 1), 128))

    # Prefer keeping every group resident: x then streams from HBM once.
    tg_resident = _round_up(max(num_groups, 1), 8)
    if _vmem_estimate(128, tg_resident, d, itemsize) <= budget:
        tg = tg_resident
    else:
        tg = _round_up(min(tile_g, max(num_groups, 1)), 8)

    while _vmem_estimate(tn, tg, d, itemsize) > budget and tn > 128:
        tn = _round_up(tn // 2, 128)
    while _vmem_estimate(tn, tg, d, itemsize) > budget and tg > 8:
        tg = _round_up(tg // 2, 8)
    return tn, tg


# --------------------------------------------------------------------------
# Public entry point
# --------------------------------------------------------------------------
def weighted_avg_pool_reducer(x, supercase_indices, weight, bias, num_groups,
                              *, tile_n=1024, tile_g=2048,
                              compute_dtype=jnp.float32, num_core_splits=None):
    """
    x:                 (N, D) float
    supercase_indices: (N,)   int32, values in [0, num_groups)
    weight:            (1, D) float   (nn.Linear(D, 1).weight)
    bias:              (1,)   float   (nn.Linear(D, 1).bias)
    num_groups:        int == bincount(supercase_indices).shape[0] == max+1

    compute_dtype: dtype used to stream x / drive the MXU.  float32 gives
      exact parity with the PyTorch module; bfloat16 halves HBM traffic and
      runs the MXU at native bf16 rate (accumulation stays float32).
    num_core_splits: leading "parallel" split of the N reduction (None =
      auto: 2 on multi-TensorCore chips, 1 otherwise).

    Returns (pooled (num_groups, D) f32, weights (N, 1) f32).
    """
    N, D = x.shape
    compute_dtype = jnp.dtype(compute_dtype)
    x = jnp.asarray(x, compute_dtype)
    w_row = jnp.asarray(weight, compute_dtype).reshape(1, D)
    b_vec = jnp.asarray(bias, jnp.float32).reshape(1)
    idx = jnp.asarray(supercase_indices, jnp.int32).reshape(1, N)

    budget = _vmem_budget_bytes()
    tn, tg = _select_tiles(N, D, num_groups, tile_n, tile_g,
                           compute_dtype.itemsize, budget)

    # N tiling + optional core split over the reduction axis (each split
    # accumulates its own partial slab; combined below).  Only split when the
    # padding waste is zero or negligible, so single-TC chips never regress.
    n_tiles = _cdiv(N, tn)
    if num_core_splits is None:
        num_core_splits = _tensorcores_per_device()
    n_splits = 1
    if (num_core_splits > 1 and n_tiles >= num_core_splits
            and (n_tiles % num_core_splits == 0
                 or n_tiles >= 4 * num_core_splits)):
        n_splits = num_core_splits
    per_split = _cdiv(n_tiles, n_splits)
    n_pad = n_splits * per_split * tn
    if n_pad != N:
        x = jnp.pad(x, ((0, n_pad - N), (0, 0)))
        # Padded rows get group -1: they contribute nothing to sums / counts.
        idx = jnp.pad(idx, ((0, 0), (0, n_pad - N)), constant_values=-1)

    g_pad = _round_up(max(num_groups, 1), tg)
    g_tiles = g_pad // tg

    est_bytes = _vmem_estimate(tn, tg, D, compute_dtype.itemsize)
    vmem_limit = int(min(max(int(est_bytes * 1.25), 8 << 20), budget))

    grid = (n_splits, g_tiles, per_split)
    # g axis is "parallel" only when single-tiled, so the (identical-valued)
    # weights writeback can never be duplicated across cores.
    g_sem = "parallel" if g_tiles == 1 else "arbitrary"

    pooled_p, counts_p, weights_p = pl.pallas_call(
        _wapr_kernel,
        out_shape=(
            jax.ShapeDtypeStruct((n_splits * g_pad, D), jnp.float32),
            jax.ShapeDtypeStruct((n_splits * g_pad, 1), jnp.float32),
            jax.ShapeDtypeStruct((1, n_pad), jnp.float32),
        ),
        grid_spec=pltpu.PrefetchScalarGridSpec(
            num_scalar_prefetch=0,
            grid=grid,
            in_specs=[
                pl.BlockSpec((tn, D), lambda s, g, n: (s * per_split + n, 0)),
                pl.BlockSpec((1, D), lambda s, g, n: (0, 0)),
                pl.BlockSpec(memory_space=pltpu.MemorySpace.SMEM),
                pl.BlockSpec((1, tn), lambda s, g, n: (0, s * per_split + n)),
            ],
            out_specs=(
                pl.BlockSpec((tg, D), lambda s, g, n: (s * g_tiles + g, 0)),
                pl.BlockSpec((tg, 1), lambda s, g, n: (s * g_tiles + g, 0)),
                pl.BlockSpec((1, tn), lambda s, g, n: (0, s * per_split + n)),
            ),
        ),
        compiler_params=pltpu.CompilerParams(
            dimension_semantics=("parallel", g_sem, "arbitrary"),
            vmem_limit_bytes=vmem_limit,
        ),
    )(x, w_row, b_vec, idx)

    # Combine per-split partial sums / counts and divide (torch parity: a
    # group with zero members yields 0/0 -> nan, exactly like the module).
    sums = jnp.sum(pooled_p.reshape(n_splits, g_pad, D), axis=0)[:num_groups]
    counts = jnp.sum(counts_p.reshape(n_splits, g_pad, 1), axis=0)[:num_groups]
    pooled = sums / counts
    weights = weights_p[0, :N].reshape(N, 1)
    return pooled, weights


# --------------------------------------------------------------------------
# Pure-JAX reference (mirrors the PyTorch module) and self-test
# --------------------------------------------------------------------------
def _reference(x, supercase_indices, weight, bias, num_groups):
    logits = x @ weight.reshape(-1, 1) + bias.reshape(1, 1)
    weights = jax.nn.sigmoid(logits)
    xw = x * weights
    counts = jnp.bincount(supercase_indices, length=num_groups).astype(jnp.float32)
    sums = jax.ops.segment_sum(xw, supercase_indices, num_segments=num_groups)
    return sums / counts[:, None], weights


if __name__ == "__main__":
    key = jax.random.PRNGKey(0)
    k_x, k_w, k_b, k_x2, k_w2, k_b2, k_p = jax.random.split(key, 7)

    # --- Case 1: small module-like shape (8 subcases, embedding_dim 32). ---
    N, D = 8, 32
    x = jax.random.normal(k_x, (N, D), dtype=jnp.float32)
    bound = 1.0 / (D ** 0.5)
    weight = jax.random.uniform(k_w, (1, D), minval=-bound, maxval=bound,
                                dtype=jnp.float32)
    bias = jax.random.uniform(k_b, (1,), minval=-bound, maxval=bound,
                              dtype=jnp.float32)
    supercase_indices = jnp.array([0, 0, 1, 1, 1, 2, 2, 2], dtype=jnp.int32)
    num_groups = int(jnp.max(supercase_indices)) + 1

    pooled, weights = weighted_avg_pool_reducer(
        x, supercase_indices, weight, bias, num_groups)
    pooled = jax.block_until_ready(pooled)
    weights = jax.block_until_ready(weights)

    ref_pooled, ref_weights = _reference(x, supercase_indices, weight, bias,
                                         num_groups)
    assert pooled.shape == (num_groups, D)
    assert weights.shape == (N, 1)
    assert jnp.allclose(pooled, ref_pooled, atol=1e-5, rtol=1e-5)
    assert jnp.allclose(weights, ref_weights, atol=1e-6, rtol=1e-6)

    # --- Case 2: multi-tile path, exercises the core-split partial sums. ---
    N2, D2, G2 = 512, 64, 10
    x2 = jax.random.normal(k_x2, (N2, D2), dtype=jnp.float32)
    bound2 = 1.0 / (D2 ** 0.5)
    weight2 = jax.random.uniform(k_w2, (1, D2), minval=-bound2, maxval=bound2,
                                 dtype=jnp.float32)
    bias2 = jax.random.uniform(k_b2, (1,), minval=-bound2, maxval=bound2,
                               dtype=jnp.float32)
    idx2 = (jax.random.permutation(k_p, jnp.arange(N2)) % G2).astype(jnp.int32)

    pooled2, weights2 = weighted_avg_pool_reducer(
        x2, idx2, weight2, bias2, G2, tile_n=128, num_core_splits=2)
    pooled2 = jax.block_until_ready(pooled2)
    ref_pooled2, ref_weights2 = _reference(x2, idx2, weight2, bias2, G2)
    assert jnp.allclose(pooled2, ref_pooled2, atol=1e-4, rtol=1e-4)
    assert jnp.allclose(weights2, ref_weights2, atol=1e-5, rtol=1e-5)

    # --- Case 3: bf16 streaming / bf16 MXU operands (f32 accumulation). ---
    pooled3, weights3 = weighted_avg_pool_reducer(
        x2, idx2, weight2, bias2, G2, tile_n=128, num_core_splits=2,
        compute_dtype=jnp.bfloat16)
    pooled3 = jax.block_until_ready(pooled3)
    assert jnp.allclose(pooled3, ref_pooled2, atol=3e-2, rtol=3e-2)
    assert jnp.allclose(weights3, ref_weights2, atol=2e-2, rtol=2e-2)

    print("KERNEL_OK")
</pallas_src>

<mosaic_0001>
module attributes {stable_mosaic.version = 11 : i64} {
  func.func @_wapr_kernel(%arg0: i32, %arg1: i32, %arg2: i32, %arg3: memref<128x32xf32, #tpu.memory_space<vmem>>, %arg4: memref<1x32xf32, #tpu.memory_space<vmem>>, %arg5: memref<1xf32, #tpu.memory_space<smem>>, %arg6: memref<1x128xi32, #tpu.memory_space<vmem>>, %arg7: memref<8x32xf32, #tpu.memory_space<vmem>>, %arg8: memref<8x1xf32, #tpu.memory_space<vmem>>, %arg9: memref<1x128xf32, #tpu.memory_space<vmem>>) attributes {dimension_semantics = [#tpu.dimension_semantics<parallel>, #tpu.dimension_semantics<parallel>, #tpu.dimension_semantics<arbitrary>], iteration_bounds = array<i64: 1, 1, 1>, scalar_prefetch = 0 : i64, scratch_operands = 0 : i64, tpu.core_type = #tpu.core_type<tc>, window_params = [{transform_indices = @transform_0, window_bounds = array<i64: 128, 32>}, {pipeline_mode = #tpu.pipeline_mode<synchronous>, transform_indices = @transform_1, window_bounds = array<i64: 1, 32>}, {transform_indices = @transform_2, window_bounds = array<i64: 1>}, {transform_indices = @transform_3, window_bounds = array<i64: 1, 128>}, {transform_indices = @transform_4, window_bounds = array<i64: 8, 32>}, {transform_indices = @transform_5, window_bounds = array<i64: 8, 1>}, {transform_indices = @transform_6, window_bounds = array<i64: 1, 128>}]} {
    %c0_i32 = arith.constant 0 : i32
    %0 = arith.cmpi eq, %arg2, %c0_i32 : i32
    %1 = arith.extui %0 : i1 to i32
    %c0_i32_0 = arith.constant 0 : i32
    %2 = arith.cmpi ne, %1, %c0_i32_0 : i32
    scf.if %2 {
      %cst_23 = arith.constant 0.000000e+00 : f32
      %39 = vector.broadcast %cst_23 : f32 to vector<8x32xf32>
      %c0_24 = arith.constant 0 : index
      %c0_25 = arith.constant 0 : index
      %40 = vector.load %arg7[%c0_24, %c0_25] : memref<8x32xf32, #tpu.memory_space<vmem>>, vector<8x32xf32>
      tpu.vector_store %arg7[%c0_24, %c0_25], %39 {strides = array<i32>} : memref<8x32xf32, #tpu.memory_space<vmem>>, vector<8x32xf32>,
      %cst_26 = arith.constant 0.000000e+00 : f32
      %41 = vector.broadcast %cst_26 : f32 to vector<8x1xf32>
      %c0_27 = arith.constant 0 : index
      %c0_28 = arith.constant 0 : index
      %42 = vector.load %arg8[%c0_27, %c0_28] : memref<8x1xf32, #tpu.memory_space<vmem>>, vector<8x1xf32>
      tpu.vector_store %arg8[%c0_27, %c0_28], %41 {strides = array<i32>} : memref<8x1xf32, #tpu.memory_space<vmem>>, vector<8x1xf32>,
    } else {
    }
    %c0 = arith.constant 0 : index
    %c0_1 = arith.constant 0 : index
    %3 = vector.load %arg3[%c0, %c0_1] : memref<128x32xf32, #tpu.memory_space<vmem>>, vector<128x32xf32>
    %c0_2 = arith.constant 0 : index
    %c0_3 = arith.constant 0 : index
    %4 = vector.load %arg4[%c0_2, %c0_3] : memref<1x32xf32, #tpu.memory_space<vmem>>, vector<1x32xf32>
    %cst = arith.constant dense<0.000000e+00> : vector<1x128xf32>
    %5 = tpu.matmul %4, %3, %cst {dimension_numbers = #tpu.dot_dimension_numbers<[1], [1], [0], [0], [0, 0, 1, 0], [], []>} : vector<1x32xf32>, vector<128x32xf32>, vector<1x128xf32> -> vector<1x128xf32>
    %c0_4 = arith.constant 0 : index
    %6 = memref.load %arg5[%c0_4] : memref<1xf32, #tpu.memory_space<smem>>
    %7 = vector.broadcast %6 : f32 to vector<1x128xf32>
    %8 = arith.addf %5, %7 : vector<1x128xf32>
    %9 = arith.negf %8 : vector<1x128xf32>
    %10 = math.exp %9 : vector<1x128xf32>
    %cst_5 = arith.constant 1.000000e+00 : f32
    %11 = vector.broadcast %cst_5 : f32 to vector<1x128xf32>
    %12 = arith.addf %11, %10 : vector<1x128xf32>
    %13 = arith.divf %11, %12 : vector<1x128xf32>
    %c0_6 = arith.constant 0 : index
    %c0_7 = arith.constant 0 : index
    %14 = vector.load %arg9[%c0_6, %c0_7] : memref<1x128xf32, #tpu.memory_space<vmem>>, vector<1x128xf32>
    tpu.vector_store %arg9[%c0_6, %c0_7], %13 {strides = array<i32>} : memref<1x128xf32, #tpu.memory_space<vmem>>, vector<1x128xf32>,
    %c8_i32 = arith.constant 8 : i32
    %15 = arith.muli %arg1, %c8_i32 : i32
    %16 = tpu.iota {dimensions = array<i32: 0>} : vector<8x1xi32>
    %17 = vector.broadcast %15 : i32 to vector<8x1xi32>
    %18 = arith.addi %17, %16 : vector<8x1xi32>
    %c0_8 = arith.constant 0 : index
    %c0_9 = arith.constant 0 : index
    %19 = vector.load %arg6[%c0_8, %c0_9] : memref<1x128xi32, #tpu.memory_space<vmem>>, vector<1x128xi32>
    %20 = vector.broadcast %18 : vector<8x1xi32> to vector<8x128xi32>
    %21 = vector.broadcast %19 : vector<1x128xi32> to vector<8x128xi32>
    %22 = arith.cmpi eq, %20, %21 : vector<8x128xi32>
    %cst_10 = arith.constant 0.000000e+00 : f32
    %23 = vector.shape_cast %13 : vector<1x128xf32> to vector<1x128xf32>
    %24 = vector.broadcast %23 : vector<1x128xf32> to vector<8x128xf32>
    %25 = vector.broadcast %cst_10 : f32 to vector<8x128xf32>
    %26 = arith.select %22, %24, %25 : vector<8x128xi1>, vector<8x128xf32>
    %c0_11 = arith.constant 0 : index
    %c0_12 = arith.constant 0 : index
    %27 = vector.load %arg8[%c0_11, %c0_12] : memref<8x1xf32, #tpu.memory_space<vmem>>, vector<8x1xf32>
    %cst_13 = arith.constant 1.000000e+00 : f32
    %cst_14 = arith.constant 0.000000e+00 : f32
    %28 = vector.broadcast %cst_13 : f32 to vector<8x128xf32>
    %29 = vector.broadcast %cst_14 : f32 to vector<8x128xf32>
    %30 = arith.select %22, %28, %29 : vector<8x128xi1>, vector<8x128xf32>
    %cst_15 = arith.constant dense<0.000000e+00> : vector<8xf32>
    %31 = vector.multi_reduction <add>, %30, %cst_15 [1] : vector<8x128xf32> to vector<8xf32>
    %32 = vector.shape_cast %31 : vector<8xf32> to vector<8x1xf32>
    %33 = arith.addf %27, %32 : vector<8x1xf32>
    %c0_16 = arith.constant 0 : index
    %c0_17 = arith.constant 0 : index
    %34 = vector.load %arg8[%c0_16, %c0_17] : memref<8x1xf32, #tpu.memory_space<vmem>>, vector<8x1xf32>
    tpu.vector_store %arg8[%c0_16, %c0_17], %33 {strides = array<i32>} : memref<8x1xf32, #tpu.memory_space<vmem>>, vector<8x1xf32>,
    %c0_18 = arith.constant 0 : index
    %c0_19 = arith.constant 0 : index
    %35 = vector.load %arg7[%c0_18, %c0_19] : memref<8x32xf32, #tpu.memory_space<vmem>>, vector<8x32xf32>
    %cst_20 = arith.constant dense<0.000000e+00> : vector<8x32xf32>
    %36 = tpu.matmul %26, %3, %cst_20 {dimension_numbers = #tpu.dot_dimension_numbers<[1], [0], [0], [1], [0, 0, 1, 1], [], []>} : vector<8x128xf32>, vector<128x32xf32>, vector<8x32xf32> -> vector<8x32xf32>
    %37 = arith.addf %35, %36 : vector<8x32xf32>
    %c0_21 = arith.constant 0 : index
    %c0_22 = arith.constant 0 : index
    %38 = vector.load %arg7[%c0_21, %c0_22] : memref<8x32xf32, #tpu.memory_space<vmem>>, vector<8x32xf32>
    tpu.vector_store %arg7[%c0_21, %c0_22], %37 {strides = array<i32>} : memref<8x32xf32, #tpu.memory_space<vmem>>, vector<8x32xf32>,
    return
  }
  func.func @transform_0(%arg0: i32, %arg1: i32, %arg2: i32) -> (i32, i32) {
    %c1_i32 = arith.constant 1 : i32
    %0 = arith.muli %arg0, %c1_i32 : i32
    %1 = arith.addi %0, %arg2 : i32
    %c0_i32 = arith.constant 0 : i32
    %c0_i32_0 = arith.constant 0 : i32
    return %1, %c0_i32 : i32, i32
  }
  func.func @transform_1(%arg0: i32, %arg1: i32, %arg2: i32) -> (i32, i32) {
    %c0_i32 = arith.constant 0 : i32
    %c0_i32_0 = arith.constant 0 : i32
    %c0_i32_1 = arith.constant 0 : i32
    return %c0_i32, %c0_i32_0 : i32, i32
  }
  func.func @transform_2(%arg0: i32, %arg1: i32, %arg2: i32) -> i32 {
    %c0_i32 = arith.constant 0 : i32
    %c0_i32_0 = arith.constant 0 : i32
    return %c0_i32 : i32
  }
  func.func @transform_3(%arg0: i32, %arg1: i32, %arg2: i32) -> (i32, i32) {
    %c1_i32 = arith.constant 1 : i32
    %0 = arith.muli %arg0, %c1_i32 : i32
    %1 = arith.addi %0, %arg2 : i32
    %c0_i32 = arith.constant 0 : i32
    %c0_i32_0 = arith.constant 0 : i32
    return %c0_i32, %1 : i32, i32
  }
  func.func @transform_4(%arg0: i32, %arg1: i32, %arg2: i32) -> (i32, i32) {
    %c1_i32 = arith.constant 1 : i32
    %0 = arith.muli %arg0, %c1_i32 : i32
    %1 = arith.addi %0, %arg1 : i32
    %c0_i32 = arith.constant 0 : i32
    %c0_i32_0 = arith.constant 0 : i32
    return %1, %c0_i32 : i32, i32
  }
  func.func @transform_5(%arg0: i32, %arg1: i32, %arg2: i32) -> (i32, i32) {
    %c1_i32 = arith.constant 1 : i32
    %0 = arith.muli %arg0, %c1_i32 : i32
    %1 = arith.addi %0, %arg1 : i32
    %c0_i32 = arith.constant 0 : i32
    %c0_i32_0 = arith.constant 0 : i32
    return %1, %c0_i32 : i32, i32
  }
  func.func @transform_6(%arg0: i32, %arg1: i32, %arg2: i32) -> (i32, i32) {
    %c1_i32 = arith.constant 1 : i32
    %0 = arith.muli %arg0, %c1_i32 : i32
    %1 = arith.addi %0, %arg2 : i32
    %c0_i32 = arith.constant 0 : i32
    %c0_i32_0 = arith.constant 0 : i32
    return %c0_i32, %1 : i32, i32
  }
}

</mosaic_0001>

<llo_original>
// kernel: tpu_custom_call.1
$region0: #{tpu_custom_call.1}
  #allocation0 [shape = 'u32[]', space=smem, size = 0x4, offset = 0x4, fixed_abs, tag = 'smem constant byte address 0x4 - core index']
  #allocation1 [shape = 'u32[144,128]{1,0:T(1,128)}', space=vmem, size = 0x12000, scoped, tag = 'internal scratch']
  #allocation2 [shape = 'f32[1]{0:T(128)S(6)}', space=smem, size = 0x200, scoped, tag = 'scoped memory for tpu_custom_call.1']
  %s0 = inlined_call_operand.vmem [shape: f32[128,32], index: 0, kind: input, shape index: {}]
  %s1 = inlined_call_operand.vmem [shape: f32[1,32], index: 1, kind: input, shape index: {}]
  %s2 = inlined_call_operand.<no memory space> [shape: f32[1], index: 2, kind: input, shape index: {}]
  %s3 = inlined_call_operand.vmem [shape: s32[1,128], index: 3, kind: input, shape index: {}]
  %s4 = inlined_call_operand.hbm [shape: f32[8,32], index: 4, kind: output, shape index: {0}]
  %s5 = inlined_call_operand.vmem [shape: f32[8,1], index: 5, kind: output, shape index: {1}]
  %s6 = inlined_call_operand.hbm [shape: f32[1,128], index: 6, kind: output, shape index: {2}]
  %7 = xla_tuple %s4, %s5, %s6
  %s8 = sld [smem:[#allocation0]]
  $region46: #{tpu_custom_call.1} parent=0
    _
  %s10 = ssub.s32 1, %s8
  %s11 = scalar_select 0, %s10, %s8
  %12 = sst [smem:[#allocation2]] %s2
  $region1: #{tpu_custom_call.1} parent=0
    #allocation3 [shape = 'u8[4096]{0}', space=vmem, size = 0x1000, scoped, tag = 'output window, operand 0, single buffered']
    #allocation4 [shape = 's32[1]{0}', space=sflag, size = 0x4, scoped, tag = 'scoped memory for tpu_custom_call.1']
    #allocation5 [shape = 'u8[512]{0}', space=vmem, size = 0x400, scoped, tag = 'output window, operand 2, single buffered']
    #allocation6 [shape = 's32[1]{0}', space=sflag, size = 0x4, scoped, tag = 'scoped memory for tpu_custom_call.1']
    %13 = vsyncpa [#allocation4], 0
    %14 = vsyncpa [#allocation6], 0
    // Predicated region
    $region2: #{tpu_custom_call.1} parent=1 // pred_check
      _
    $region3: #{tpu_custom_call.1} parent=1 // pred_check_branch
      %16 = sbr.rel (0) target = $region5
    $region4: #{tpu_custom_call.1} parent=1 // pred_region
      %s17 = sadd.s32 0, 0
      %s18 = smul.u32 16, %s17
      %p19 = scmp.lt.s32.totalorder %s18, 15
      %s20 = scalar_select %p19, %s18, 15
      %s21 = smul.addr %s20, 8
      %s22 = scalar_lea.vmem %s0, %s21
      %s23 = sadd.s32 0, 0
      %s24 = smul.u32 16, %s23
    $region5: #{tpu_custom_call.1} parent=1 // pred_fallthru
      _
    // Predicated region
    $region6: #{tpu_custom_call.1} parent=1 // pred_check
      _
    $region7: #{tpu_custom_call.1} parent=1 // pred_check_branch
      %26 = sbr.rel (0) target = $region9
    $region8: #{tpu_custom_call.1} parent=1 // pred_region
      _
    $region9: #{tpu_custom_call.1} parent=1 // pred_fallthru
      _
    // Predicated region
    $region10: #{tpu_custom_call.1} parent=1 // pred_check
      _
    $region11: #{tpu_custom_call.1} parent=1 // pred_check_branch
      %28 = sbr.rel (0) target = $region13
    $region12: #{tpu_custom_call.1} parent=1 // pred_region
      _
    $region13: #{tpu_custom_call.1} parent=1 // pred_fallthru
      _
    // Predicated region
    $region14: #{tpu_custom_call.1} parent=1 // pred_check
      _
    $region15: #{tpu_custom_call.1} parent=1 // pred_check_branch
      %30 = sbr.rel (0) target = $region17
    $region16: #{tpu_custom_call.1} parent=1 // pred_region
      %s31 = sadd.s32 0, 0
      %p32 = scmp.lt.s32.totalorder %s31, 0
      %s33 = scalar_select %p32, %s31, 0
      %s34 = scalar_lea.vmem %s3, %s33
      %s35 = sadd.s32 0, 0
    $region17: #{tpu_custom_call.1} parent=1 // pred_fallthru
      _
    %s36 = sadd.s32 0, 0
    %s37 = smul.u32 16, %s36
    %p38 = scmp.lt.s32.totalorder %s37, 15
    %s39 = scalar_select %p38, %s37, 15
    %s40 = smul.addr %s39, 8
    %s41 = scalar_lea.vmem %s0, %s40
    %s42 = sadd.s32 0, 0
    %p43 = scmp.lt.s32.totalorder %s42, 0
    %s44 = scalar_select %p43, %s42, 0
    %s45 = scalar_lea.vmem %s3, %s44
    %s46 = sadd.s32 0, 0
    %p47 = scmp.lt.s32.totalorder %s46, 0
    %s48 = scalar_select %p47, %s46, 0
    %s49 = smul.addr %s48, 8
    %s50 = scalar_lea.vmem %s5, %s49
    %s51 = sadd.s32 0, 0
    %s52 = smul.u32 16, %s51
    %p53 = scmp.lt.s32.totalorder %s52, 15
    %s54 = scalar_select %p53, %s52, 15
    %s55 = smul.addr %s54, 8
    %s56 = scalar_lea.vmem %s0, %s55
    %s57 = sadd.s32 0, 0
    %s58 = smul.u32 16, %s57
    %s59 = sadd.s32 0, 0
    %p60 = scmp.lt.s32.totalorder %s59, 0
    %s61 = scalar_select %p60, %s59, 0
    %s62 = scalar_lea.vmem %s3, %s61
    %s63 = sadd.s32 0, 0
    %s64 = sadd.s32 0, 0
    %s65 = sadd.s32 0, 0
    %p66 = scmp.lt.s32.totalorder %s65, 0
    %s67 = scalar_select %p66, %s65, 0
    %s68 = smul.addr %s67, 8
    %s69 = scalar_lea.vmem %s5, %s68
    %s70 = sadd.s32 0, 0
    %s71 = sadd.s32 0, 0
    %p72 = scmp.eq.s32.totalorder 0, 0
    // Predicated region
    $region18: #{tpu_custom_call.1} parent=1 // pred_check
      %p73 = pneg %p72
    $region19: #{tpu_custom_call.1} parent=1 // pred_check_branch
      %75 = sbr.rel (%p73) target = $region21
    $region20: #{tpu_custom_call.1} parent=1 // pred_region
      %vm76 = vcmask 261120
      %77 = vst.msk [vmem:[#allocation3] sm:$0xff] %vm76, 0.0
      %vm78 = vcmask 7168
      %79 = vst.msk [vmem:[%s69] sm:$0xff] %vm78, 0.0
    $region21: #{tpu_custom_call.1} parent=1 // pred_fallthru
      _
    %v80 = vld [vmem:[%s56] sm:$0xff]
    %v81 = vld [vmem:[%s56 + $0x8] sm:$0xff]
    %v82 = vld [vmem:[%s56 + $0x10] sm:$0xff]
    %v83 = vld [vmem:[%s56 + $0x18] sm:$0xff]
    %v84 = vld [vmem:[%s56 + $0x20] sm:$0xff]
    %v85 = vld [vmem:[%s56 + $0x28] sm:$0xff]
    %v86 = vld [vmem:[%s56 + $0x30] sm:$0xff]
    %v87 = vld [vmem:[%s56 + $0x38] sm:$0xff]
    %v88 = vld [vmem:[%s56 + $0x40] sm:$0xff]
    %v89 = vld [vmem:[%s56 + $0x48] sm:$0xff]
    %v90 = vld [vmem:[%s56 + $0x50] sm:$0xff]
    %v91 = vld [vmem:[%s56 + $0x58] sm:$0xff]
    %v92 = vld [vmem:[%s56 + $0x60] sm:$0xff]
    %v93 = vld [vmem:[%s56 + $0x68] sm:$0xff]
    %v94 = vld [vmem:[%s56 + $0x70] sm:$0xff]
    %v95 = vld [vmem:[%s56 + $0x78] sm:$0xff]
    %v96 = vld [vmem:[%s1] sm:$0x1]
    %s97 = sld [smem:[#allocation2]]
    %v98 = vstv %s97
    %vm99 = vcmask 261120
    %v101 = vsel %vm99, %v96, 0
    %v104 = vsel %vm99, %v80, 0
    %v107 = vsel %vm99, %v81, 0
    %v110 = vsel %vm99, %v82, 0
    %v113 = vsel %vm99, %v83, 0
    %v116 = vsel %vm99, %v84, 0
    %v119 = vsel %vm99, %v85, 0
    %v122 = vsel %vm99, %v86, 0
    %v125 = vsel %vm99, %v87, 0
    %v128 = vsel %vm99, %v88, 0
    %v131 = vsel %vm99, %v89, 0
    %v134 = vsel %vm99, %v90, 0
    %v137 = vsel %vm99, %v91, 0
    %v140 = vsel %vm99, %v92, 0
    %v143 = vsel %vm99, %v93, 0
    %v146 = vsel %vm99, %v94, 0
    %v149 = vsel %vm99, %v95, 0
    %151 = vmatprep.subr.mxu0 0.0
    %152 = vmatpush1.xpose.msra.mxu0 %v149
    %153 = vmatprep.subr.mxu0 0.0
    %154 = vmatpush1.xpose.msra.mxu0 %v146
    %155 = vmatprep.subr.mxu0 0.0
    %156 = vmatpush1.xpose.msra.mxu0 %v143
    %157 = vmatprep.subr.mxu0 0.0
    %158 = vmatpush1.xpose.msra.mxu0 %v140
    %159 = vmatprep.subr.mxu0 0.0
    %160 = vmatpush1.xpose.msra.mxu0 %v137
    %161 = vmatprep.subr.mxu0 0.0
    %162 = vmatpush1.xpose.msra.mxu0 %v134
    %163 = vmatprep.subr.mxu0 0.0
    %164 = vmatpush1.xpose.msra.mxu0 %v131
    %165 = vmatprep.subr.mxu0 0.0
    %166 = vmatpush1.xpose.msra.mxu0 %v128
    %167 = vmatprep.subr.mxu0 0.0
    %168 = vmatpush1.xpose.msra.mxu0 %v125
    %169 = vmatprep.subr.mxu0 0.0
    %170 = vmatpush1.xpose.msra.mxu0 %v122
    %171 = vmatprep.subr.mxu0 0.0
    %172 = vmatpush1.xpose.msra.mxu0 %v119
    %173 = vmatprep.subr.mxu0 0.0
    %174 = vmatpush1.xpose.msra.mxu0 %v116
    %175 = vmatprep.subr.mxu0 0.0
    %176 = vmatpush1.xpose.msra.mxu0 %v113
    %177 = vmatprep.subr.mxu0 0.0
    %178 = vmatpush1.xpose.msra.mxu0 %v110
    %179 = vmatprep.subr.mxu0 0.0
    %180 = vmatpush1.xpose.msra.mxu0 %v107
    %181 = vmatprep.subr.mxu0 0.0
    %182 = vmatpush1.xpose.msra.mxu0 %v104
    %183 = vmatprep.subr.mxu0 0.0
    %184 = vmatpush2.xpose.msra.mxu0 0.0
    %185 = vmatprep.subr.mxu0 0.0
    %186 = vmatpush2.xpose.msra.mxu0 0.0
    %187 = vmatprep.subr.mxu0 0.0
    %188 = vmatpush2.xpose.msra.mxu0 0.0
    %189 = vmatprep.subr.mxu0 0.0
    %190 = vmatpush2.xpose.msra.mxu0 0.0
    %191 = vmatprep.subr.mxu0 0.0
    %192 = vmatpush2.xpose.msra.mxu0 0.0
    %193 = vmatprep.subr.mxu0 0.0
    %194 = vmatpush2.xpose.msra.mxu0 0.0
    %195 = vmatprep.subr.mxu0 0.0
    %196 = vmatpush2.xpose.msra.mxu0 0.0
    %197 = vmatprep.subr.mxu0 0.0
    %198 = vmatpush2.xpose.msra.mxu0 0.0
    %199 = vmatprep.subr.mxu0 0.0
    %200 = vmatpush2.xpose.msra.mxu0 0.0
    %201 = vmatprep.subr.mxu0 0.0
    %202 = vmatpush2.xpose.msra.mxu0 0.0
    %203 = vmatprep.subr.mxu0 0.0
    %204 = vmatpush2.xpose.msra.mxu0 0.0
    %205 = vmatprep.subr.mxu0 0.0
    %206 = vmatpush2.xpose.msra.mxu0 0.0
    %207 = vmatprep.subr.mxu0 0.0
    %208 = vmatpush2.xpose.msra.mxu0 0.0
    %209 = vmatprep.subr.mxu0 0.0
    %210 = vmatpush2.xpose.msra.mxu0 0.0
    %211 = vmatprep.subr.mxu0 0.0
    %212 = vmatpush2.xpose.msra.mxu0 0.0
    %213 = vmatprep.subr.mxu0 0.0
    %214 = vmatpush2.xpose.msra.mxu0 0.0
    %215 = vmatprep.mubr.f32.mxu0 0.0
    %216 = vmatmul.mubr.f32.gmra.mxu0 %v101
    %v217 = vpop.f32.mrf.mxu0
    %v218 = vadd.f32 %v98, %v217
    %v219 = vpop.f32.mrf.mxu0
    %220 = vdwg.mxu0
    %v221 = vxor.u32 %v218, 2147483648
    %v222 = vmul.f32 %v221, 1.442695
    %v223 = vpow.pop %v222
    %v224 = vadd.f32 %v223, 1.0
    %v225 = vrcp.pop %v224
    %v226 = vmul.f32 1.0, %v225
    %227 = vst [vmem:[#allocation5] sm:$0x1] %v226
    %s228 = smul.u32 0, 8
    %v229 = vlaneseq
    %v230 = vshrl.u32 %v229, 7
    %v231 = vstv %s228
    %v232 = vadd.s32 %v231, %v230
    %v233 = vld [vmem:[%s62] sm:$0x1]
    %v234 = vlaneseq
    %v235 = vshrl.u32 %v234, 7
    %v236 = vsub.s32 0, %v235
    %v237 = vrot.slane %v233, %v236
    %vm238 = vcmp.eq.s32.totalorder %v232, %v237
    %v239 = vlaneseq
    %v240 = vshrl.u32 %v239, 7
    %v241 = vsub.s32 0, %v240
    %v242 = vrot.slane %v226, %v241
    %v243 = vsel %vm238, %v242, 0.0
    %v244 = vld [vmem:[%s69] sm:$0xff]
    %v245 = vsel %vm238, 1.0, 0.0
    %246 = vadd.xlane.f32.xlu0 %v245
    %v247 = vpop.xlane.xlu0 %246
    %v248 = vadd.f32 %v244, %v247
    %vm249 = vcmask 7168
    %250 = vst.msk [vmem:[%s69] sm:$0xff] %vm249, %v248
    %v251 = vld [vmem:[#allocation3] sm:$0xff]
    %252 = vmatprep.subr.mxu0 0.0
    %253 = vmatpush1.msra.mxu0 %v95
    %254 = vmatprep.subr.mxu0 0.0
    %255 = vmatpush1.msra.mxu0 %v94
    %256 = vmatprep.subr.mxu0 0.0
    %257 = vmatpush1.msra.mxu0 %v93
    %258 = vmatprep.subr.mxu0 0.0
    %259 = vmatpush1.msra.mxu0 %v92
    %260 = vmatprep.subr.mxu0 0.0
    %261 = vmatpush1.msra.mxu0 %v91
    %262 = vmatprep.subr.mxu0 0.0
    %263 = vmatpush1.msra.mxu0 %v90
    %264 = vmatprep.subr.mxu0 0.0
    %265 = vmatpush1.msra.mxu0 %v89
    %266 = vmatprep.subr.mxu0 0.0
    %267 = vmatpush1.msra.mxu0 %v88
    %268 = vmatprep.subr.mxu0 0.0
    %269 = vmatpush1.msra.mxu0 %v87
    %270 = vmatprep.subr.mxu0 0.0
    %271 = vmatpush1.msra.mxu0 %v86
    %272 = vmatprep.subr.mxu0 0.0
    %273 = vmatpush1.msra.mxu0 %v85
    %274 = vmatprep.subr.mxu0 0.0
    %275 = vmatpush1.msra.mxu0 %v84
    %276 = vmatprep.subr.mxu0 0.0
    %277 = vmatpush1.msra.mxu0 %v83
    %278 = vmatprep.subr.mxu0 0.0
    %279 = vmatpush1.msra.mxu0 %v82
    %280 = vmatprep.subr.mxu0 0.0
    %281 = vmatpush1.msra.mxu0 %v81
    %282 = vmatprep.subr.mxu0 0.0
    %283 = vmatpush1.msra.mxu0 %v80
    %284 = vmatprep.subr.mxu0 0.0
    %285 = vmatpush2.msra.mxu0 0.0
    %286 = vmatprep.subr.mxu0 0.0
    %287 = vmatpush2.msra.mxu0 0.0
    %288 = vmatprep.subr.mxu0 0.0
    %289 = vmatpush2.msra.mxu0 0.0
    %290 = vmatprep.subr.mxu0 0.0
    %291 = vmatpush2.msra.mxu0 0.0
    %292 = vmatprep.subr.mxu0 0.0
    %293 = vmatpush2.msra.mxu0 0.0
    %294 = vmatprep.subr.mxu0 0.0
    %295 = vmatpush2.msra.mxu0 0.0
    %296 = vmatprep.subr.mxu0 0.0
    %297 = vmatpush2.msra.mxu0 0.0
    %298 = vmatprep.subr.mxu0 0.0
    %299 = vmatpush2.msra.mxu0 0.0
    %300 = vmatprep.subr.mxu0 0.0
    %301 = vmatpush2.msra.mxu0 0.0
    %302 = vmatprep.subr.mxu0 0.0
    %303 = vmatpush2.msra.mxu0 0.0
    %304 = vmatprep.subr.mxu0 0.0
    %305 = vmatpush2.msra.mxu0 0.0
    %306 = vmatprep.subr.mxu0 0.0
    %307 = vmatpush2.msra.mxu0 0.0
    %308 = vmatprep.subr.mxu0 0.0
    %309 = vmatpush2.msra.mxu0 0.0
    %310 = vmatprep.subr.mxu0 0.0
    %311 = vmatpush2.msra.mxu0 0.0
    %312 = vmatprep.subr.mxu0 0.0
    %313 = vmatpush2.msra.mxu0 0.0
    %314 = vmatprep.subr.mxu0 0.0
    %315 = vmatpush2.msra.mxu0 0.0
    %316 = vmatprep.mubr.f32.mxu0 0.0
    %317 = vmatmul.mubr.f32.gmra.mxu0 %v243
    %v318 = vpop.f32.mrf.mxu0
    %v319 = vadd.f32 0.0, %v318
    %v320 = vpop.f32.mrf.mxu0
    %321 = vdwg.mxu0
    %v322 = vadd.f32 %v251, %v319
    %323 = vst.msk [vmem:[#allocation3] sm:$0xff] %vm99, %v322
    %s324 = sadd.s32 0, 0
    %p325 = scmp.lt.s32.totalorder %s324, 0
    %s326 = scalar_select %p325, %s324, 0
    %s327 = smul.addr %s326, 8
    %s328 = scalar_lea.vmem %s5, %s327
    // Predicated region
    $region22: #{tpu_custom_call.1} parent=1 // pred_check
      _
    $region23: #{tpu_custom_call.1} parent=1 // pred_check_branch
      %330 = sbr.rel (0) target = $region25
    $region24: #{tpu_custom_call.1} parent=1 // pred_region
      %s331 = sadd.s32 0, 0
      %s333 = ssub.s32 128, 128
      %334 = vsyncadd [#allocation4], %s333
      %s335 = smul.addr %s331, 128
      %s336 = scalar_lea.hbm %s4, %s335
      %s338 = sshll.u32 [#allocation3], 4
      %s339 = int_to_ptr.vmem [resolvable:$true] %s338
      %341 = dma.vmem_to_hbm [thread:$0]  %s339, 128, %s336, [#allocation4]
    $region25: #{tpu_custom_call.1} parent=1 // pred_fallthru
      _
    // Predicated region
    $region26: #{tpu_custom_call.1} parent=1 // pred_check
      _
    $region27: #{tpu_custom_call.1} parent=1 // pred_check_branch
      %343 = sbr.rel (0) target = $region29
    $region28: #{tpu_custom_call.1} parent=1 // pred_region
      %s344 = sadd.s32 0, 0
    $region29: #{tpu_custom_call.1} parent=1 // pred_fallthru
      _
    // Predicated region
    $region30: #{tpu_custom_call.1} parent=1 // pred_check
      _
    $region31: #{tpu_custom_call.1} parent=1 // pred_check_branch
      %346 = sbr.rel (0) target = $region33
    $region32: #{tpu_custom_call.1} parent=1 // pred_region
      %s347 = sadd.s32 0, 0
      %s349 = ssub.s32 16, 16
      %350 = vsyncadd [#allocation6], %s349
      %s351 = smul.addr %s347, 16
      %s352 = scalar_lea.hbm %s6, %s351
      %s354 = sshll.u32 [#allocation5], 4
      %s355 = int_to_ptr.vmem [resolvable:$true] %s354
      %357 = dma.vmem_to_hbm [thread:$0]  %s355, 16, %s352, [#allocation6]
    $region33: #{tpu_custom_call.1} parent=1 // pred_fallthru
      _
    // Predicated region
    $region34: #{tpu_custom_call.1} parent=1 // pred_check
      _
    $region35: #{tpu_custom_call.1} parent=1 // pred_check_branch
      %359 = sbr.rel (0) target = $region37
    $region36: #{tpu_custom_call.1} parent=1 // pred_region
      %360 = dma.done [#allocation4], 128
    $region37: #{tpu_custom_call.1} parent=1 // pred_fallthru
      _
    // Predicated region
    $region38: #{tpu_custom_call.1} parent=1 // pred_check
      _
    $region39: #{tpu_custom_call.1} parent=1 // pred_check_branch
      %362 = sbr.rel (0) target = $region41
    $region40: #{tpu_custom_call.1} parent=1 // pred_region
      %s363 = sadd.s32 0, 0
      %p364 = scmp.lt.s32.totalorder %s363, 0
      %s365 = scalar_select %p364, %s363, 0
      %s366 = smul.addr %s365, 8
      %s367 = scalar_lea.vmem %s5, %s366
    $region41: #{tpu_custom_call.1} parent=1 // pred_fallthru
      _
    // Predicated region
    $region42: #{tpu_custom_call.1} parent=1 // pred_check
      _
    $region43: #{tpu_custom_call.1} parent=1 // pred_check_branch
      %369 = sbr.rel (0) target = $region45
    $region44: #{tpu_custom_call.1} parent=1 // pred_region
      %370 = dma.done [#allocation6], 16
    $region45: #{tpu_custom_call.1} parent=1 // pred_fallthru
      _
    %371 = vsyncpa [#allocation4], 1
    %372 = vsyncpa [#allocation6], 1

</llo_original>
